<compile_context>
chip_gen: v7x
topology: tpu7x:2x2x1
jax: 0.10.0
libtpu: 0.0.40
codegen_flags: <defaults>
</compile_context>

<pallas_src>
import functools

import jax
import jax.numpy as jnp
from jax.experimental import pallas as pl
from jax.experimental.pallas import tpu as pltpu

HIDDEN = 128
_W3_ROWS = 8  # Linear(128, 1) weight padded to 8 MXU rows (row 0 is the real weight).


def _disc_kernel(xT_ref, w1_ref, b1_ref, w2_ref, b2_ref, w3_ref, b3_ref, o_ref):
    """Fused 3-layer MLP forward for one batch tile (batch on the lane axis).

    xT_ref: (nc, TB)       input tile, f32 (cast in-kernel to the weight dtype)
    w1_ref: (128, nc)      torch Linear(nc,128).weight        (f32 or bf16)
    b1_ref: (128, 1)       bias column                        (f32)
    w2_ref: (128, 128)     torch Linear(128,128).weight       (f32 or bf16)
    b2_ref: (128, 1)       bias column                        (f32)
    w3_ref: (8, 128)       Linear(128,1).weight padded to 8 rows (row 0 real, f32)
    b3_ref: (1, 1)         scalar bias in SMEM                (f32)
    o_ref:  (1, TB)        lane-dense output row
    """
    # In-kernel cast (bf16 on v6e/v7x when weights are bf16); f32 path is a no-op.
    x = xT_ref[...].astype(w1_ref.dtype)

    # Layer 1: (128, nc) @ (nc, TB) -> (128, TB), f32 accumulation on the MXU.
    h1 = jnp.dot(w1_ref[...], x, preferred_element_type=jnp.float32) + b1_ref[...]
    h1 = jnp.maximum(h1, 0.2 * h1).astype(w2_ref.dtype)   # LeakyReLU(0.2): mul + max

    # Layer 2: (128, 128) @ (128, TB) -> (128, TB).  Batch-as-N fills the wide MXU.
    h2 = jnp.dot(w2_ref[...], h1, preferred_element_type=jnp.float32) + b2_ref[...]
    h2 = jnp.maximum(h2, 0.2 * h2)   # stays f32: layer-3 MAC count is negligible

    # Layer 3: (8, 128) @ (128, TB) -> (8, TB); row 0 is the real Linear(128,1) output.
    out8 = jnp.dot(w3_ref[...], h2, preferred_element_type=jnp.float32)
    o_ref[...] = (out8[0:1, :] + b3_ref[0, 0]).astype(o_ref.dtype)


def _round_up(v, m):
    return ((v + m - 1) // m) * m


@functools.partial(jax.jit, static_argnames=("tile_b",))
def discriminator_forward(x, params, tile_b=2048):
    """x: [B, nc] float32.  Returns [B, 1] float32 (matches the torch module)."""
    w1, b1, w2, b2, w3p, b3 = params
    B, nc = x.shape
    assert tile_b % 128 == 0, "tile_b must be a multiple of 128"
    tile_b = min(tile_b, 4096)  # v5e scoped-VMEM safety cap; v6e/v7x are fine well past this

    # Effective batch tile:
    #   * tiny batches  -> single block (no per-step grid overhead)
    #   * large batches -> at least 2 grid steps so ("parallel",) can shard across
    #     the 2 TensorCores on v7x (no cost on single-TC v5e/v6e).
    if B <= 2 * 128:
        tb = _round_up(max(B, 1), 128)
    else:
        tb = min(tile_b, _round_up((B + 1) // 2, 128))
    grid = (pl.cdiv(B, tb),)

    # Batch on the lane axis: x^T is only B*nc floats, so this transpose is trivial and
    # replaces a per-tile in-kernel XLU transpose + 32x-padded (TB, nc) VMEM tile.
    xT = x.T  # (nc, B)

    flops = 2 * B * (nc * HIDDEN + HIDDEN * HIDDEN + HIDDEN * _W3_ROWS)
    bytes_accessed = int(
        x.size * x.dtype.itemsize
        + sum(int(a.size) * a.dtype.itemsize for a in (w1, b1, w2, b2, w3p, b3))
        + B * 4)

    out = pl.pallas_call(
        _disc_kernel,
        out_shape=jax.ShapeDtypeStruct((1, B), jnp.float32),
        grid_spec=pltpu.PrefetchScalarGridSpec(
            num_scalar_prefetch=0,
            grid=grid,
            in_specs=[
                # batch-tiled x^T: (nc, TB) — batch on lanes
                pl.BlockSpec((nc, tb), lambda i: (0, i)),
                # weights / biases: full arrays, same block every grid step (resident)
                pl.BlockSpec((HIDDEN, nc), lambda i: (0, 0)),
                pl.BlockSpec((HIDDEN, 1), lambda i: (0, 0)),
                pl.BlockSpec((HIDDEN, HIDDEN), lambda i: (0, 0)),
                pl.BlockSpec((HIDDEN, 1), lambda i: (0, 0)),
                pl.BlockSpec((_W3_ROWS, HIDDEN), lambda i: (0, 0)),
                # scalar bias in SMEM (no padded (1,1) VMEM tile / DMA)
                pl.BlockSpec(memory_space=pltpu.MemorySpace.SMEM),
            ],
            # lane-dense output row: batch on the lane axis -> unmasked 128-wide stores
            out_specs=pl.BlockSpec((1, tb), lambda i: (0, i)),
        ),
        compiler_params=pltpu.CompilerParams(
            dimension_semantics=("parallel",),  # shards batch tiles across v7x's 2 TCs
        ),
        cost_estimate=pl.CostEstimate(
            flops=flops, transcendentals=0, bytes_accessed=bytes_accessed),
    )(xT, w1, b1, w2, b2, w3p, b3)

    # Torch module returns [B, 1]; keep that contract (trivial reshape of a (1, B) row).
    return out.reshape(B, 1)


def init_params(nc, key):
    """Deterministic init matching the PyTorch module's parameter layouts.

    torch nn.Linear(in, out) stores weight as [out, in]; with batch-on-columns the kernel
    computes y_col = W @ x_col + b_col, so weights are kept exactly in torch layout and
    biases as column vectors.  The Linear(128, 1) weight is zero-padded to (8, 128).
    """
    k1, k2, k3, k4, k5, k6 = jax.random.split(key, 6)

    def uniform(k, shape, fan_in):
        bound = 1.0 / jnp.sqrt(fan_in)
        return jax.random.uniform(k, shape, jnp.float32, -bound, bound)

    w1 = uniform(k1, (HIDDEN, nc), nc)           # torch Linear(nc,128).weight
    b1 = uniform(k2, (HIDDEN, 1), nc)
    w2 = uniform(k3, (HIDDEN, HIDDEN), HIDDEN)   # torch Linear(128,128).weight
    b2 = uniform(k4, (HIDDEN, 1), HIDDEN)
    w3_row = uniform(k5, (1, HIDDEN), HIDDEN)    # torch Linear(128,1).weight
    b3 = uniform(k6, (1, 1), HIDDEN)
    w3p = jnp.zeros((_W3_ROWS, HIDDEN), jnp.float32).at[0:1, :].set(w3_row)
    return (w1, b1, w2, b2, w3p, b3)


def cast_params_bf16(params):
    """One-time weight cast for the bf16 MXU path (v6e/v7x): W1/W2 -> bf16;
    biases and the tiny W3 stay f32 (layer-3 cost is negligible, avoids packed transposes)."""
    w1, b1, w2, b2, w3p, b3 = params
    return (w1.astype(jnp.bfloat16), b1, w2.astype(jnp.bfloat16), b2, w3p, b3)


def reference_forward(x, params):
    w1, b1, w2, b2, w3p, b3 = params
    w1f = w1.astype(jnp.float32)
    w2f = w2.astype(jnp.float32)
    h1 = x @ w1f.T + b1.T
    h1 = jnp.where(h1 > 0, h1, 0.2 * h1)
    h2 = h1 @ w2f.T + b2.T
    h2 = jnp.where(h2 > 0, h2, 0.2 * h2)
    return h2 @ w3p[0:1, :].T + b3


if __name__ == "__main__":
    nc = 4  # feature dim of the gaussian-mixture samples
    key = jax.random.PRNGKey(0)
    k_x1, k_x2, k_p = jax.random.split(key, 3)
    params = init_params(nc, k_p)

    # Case 1: tiny batch -> single-block kernel (no per-step grid overhead).
    x_small = jax.random.normal(k_x1, (8, nc), jnp.float32)
    out_small = jax.block_until_ready(discriminator_forward(x_small, params))
    ref_small = reference_forward(x_small, params)
    assert out_small.shape == (8, 1), out_small.shape
    assert jnp.allclose(out_small, ref_small, atol=1e-4, rtol=1e-4)

    # Case 2: non-divisible batch -> 2 grid steps (v7x 2-TC shardable) with a masked
    # partial last block.
    B = 300
    x_big = jax.random.normal(k_x2, (B, nc), jnp.float32)
    out_big = jax.block_until_ready(discriminator_forward(x_big, params))
    ref_big = reference_forward(x_big, params)
    assert out_big.shape == (B, 1), out_big.shape
    assert jnp.allclose(out_big, ref_big, atol=1e-4, rtol=1e-4)

    # Case 3: bf16 weights (v6e/v7x MXU path) pre-cast once; x cast in-kernel; f32 accum.
    params_bf16 = cast_params_bf16(params)
    out_bf16 = jax.block_until_ready(discriminator_forward(x_big, params_bf16))
    assert out_bf16.shape == (B, 1), out_bf16.shape
    assert jnp.allclose(out_bf16, ref_big, atol=1e-1, rtol=5e-2)

    print("KERNEL_OK")
</pallas_src>

<mosaic_0001>
module attributes {stable_mosaic.version = 11 : i64} {
  func.func @_disc_kernel(%arg0: i32, %arg1: memref<4x128xf32, #tpu.memory_space<vmem>>, %arg2: memref<128x4xf32, #tpu.memory_space<vmem>>, %arg3: memref<128x1xf32, #tpu.memory_space<vmem>>, %arg4: memref<128x128xf32, #tpu.memory_space<vmem>>, %arg5: memref<128x1xf32, #tpu.memory_space<vmem>>, %arg6: memref<8x128xf32, #tpu.memory_space<vmem>>, %arg7: memref<1x1xf32, #tpu.memory_space<smem>>, %arg8: memref<1x128xf32, #tpu.memory_space<vmem>>) attributes {dimension_semantics = [#tpu.dimension_semantics<parallel>], iteration_bounds = array<i64: 1>, scalar_prefetch = 0 : i64, scratch_operands = 0 : i64, tpu.core_type = #tpu.core_type<tc>, window_params = [{transform_indices = @transform_0, window_bounds = array<i64: 4, 128>}, {pipeline_mode = #tpu.pipeline_mode<synchronous>, transform_indices = @transform_1, window_bounds = array<i64: 128, 4>}, {pipeline_mode = #tpu.pipeline_mode<synchronous>, transform_indices = @transform_2, window_bounds = array<i64: 128, 1>}, {pipeline_mode = #tpu.pipeline_mode<synchronous>, transform_indices = @transform_3, window_bounds = array<i64: 128, 128>}, {pipeline_mode = #tpu.pipeline_mode<synchronous>, transform_indices = @transform_4, window_bounds = array<i64: 128, 1>}, {pipeline_mode = #tpu.pipeline_mode<synchronous>, transform_indices = @transform_5, window_bounds = array<i64: 8, 128>}, {transform_indices = @transform_6, window_bounds = array<i64: 1, 1>}, {transform_indices = @transform_7, window_bounds = array<i64: 1, 128>}]} {
    %c0 = arith.constant 0 : index
    %c0_0 = arith.constant 0 : index
    %0 = vector.load %arg1[%c0, %c0_0] : memref<4x128xf32, #tpu.memory_space<vmem>>, vector<4x128xf32>
    %c0_1 = arith.constant 0 : index
    %c0_2 = arith.constant 0 : index
    %1 = vector.load %arg2[%c0_1, %c0_2] : memref<128x4xf32, #tpu.memory_space<vmem>>, vector<128x4xf32>
    %cst = arith.constant dense<0.000000e+00> : vector<128x128xf32>
    %2 = tpu.matmul %1, %0, %cst {dimension_numbers = #tpu.dot_dimension_numbers<[1], [0], [0], [1], [0, 0, 1, 1], [], []>} : vector<128x4xf32>, vector<4x128xf32>, vector<128x128xf32> -> vector<128x128xf32>
    %c0_3 = arith.constant 0 : index
    %c0_4 = arith.constant 0 : index
    %3 = vector.load %arg3[%c0_3, %c0_4] : memref<128x1xf32, #tpu.memory_space<vmem>>, vector<128x1xf32>
    %4 = vector.broadcast %3 : vector<128x1xf32> to vector<128x128xf32>
    %5 = arith.addf %2, %4 : vector<128x128xf32>
    %cst_5 = arith.constant 2.000000e-01 : f32
    %6 = vector.broadcast %cst_5 : f32 to vector<128x128xf32>
    %7 = arith.mulf %6, %5 : vector<128x128xf32>
    %8 = arith.maximumf %5, %7 : vector<128x128xf32>
    %c0_6 = arith.constant 0 : index
    %c0_7 = arith.constant 0 : index
    %9 = vector.load %arg4[%c0_6, %c0_7] : memref<128x128xf32, #tpu.memory_space<vmem>>, vector<128x128xf32>
    %cst_8 = arith.constant dense<0.000000e+00> : vector<128x128xf32>
    %10 = tpu.matmul %9, %8, %cst_8 {dimension_numbers = #tpu.dot_dimension_numbers<[1], [0], [0], [1], [0, 0, 1, 1], [], []>} : vector<128x128xf32>, vector<128x128xf32>, vector<128x128xf32> -> vector<128x128xf32>
    %c0_9 = arith.constant 0 : index
    %c0_10 = arith.constant 0 : index
    %11 = vector.load %arg5[%c0_9, %c0_10] : memref<128x1xf32, #tpu.memory_space<vmem>>, vector<128x1xf32>
    %12 = vector.broadcast %11 : vector<128x1xf32> to vector<128x128xf32>
    %13 = arith.addf %10, %12 : vector<128x128xf32>
    %cst_11 = arith.constant 2.000000e-01 : f32
    %14 = vector.broadcast %cst_11 : f32 to vector<128x128xf32>
    %15 = arith.mulf %14, %13 : vector<128x128xf32>
    %16 = arith.maximumf %13, %15 : vector<128x128xf32>
    %c0_12 = arith.constant 0 : index
    %c0_13 = arith.constant 0 : index
    %17 = vector.load %arg6[%c0_12, %c0_13] : memref<8x128xf32, #tpu.memory_space<vmem>>, vector<8x128xf32>
    %cst_14 = arith.constant dense<0.000000e+00> : vector<8x128xf32>
    %18 = tpu.matmul %17, %16, %cst_14 {dimension_numbers = #tpu.dot_dimension_numbers<[1], [0], [0], [1], [0, 0, 1, 1], [], []>} : vector<8x128xf32>, vector<128x128xf32>, vector<8x128xf32> -> vector<8x128xf32>
    %19 = vector.extract_strided_slice %18 {offsets = [0, 0], sizes = [1, 128], strides = [1, 1]} : vector<8x128xf32> to vector<1x128xf32>
    %c0_15 = arith.constant 0 : index
    %c0_16 = arith.constant 0 : index
    %20 = memref.load %arg7[%c0_15, %c0_16] : memref<1x1xf32, #tpu.memory_space<smem>>
    %21 = vector.broadcast %20 : f32 to vector<1x128xf32>
    %22 = arith.addf %19, %21 : vector<1x128xf32>
    %c0_17 = arith.constant 0 : index
    %c0_18 = arith.constant 0 : index
    %23 = vector.load %arg8[%c0_17, %c0_18] : memref<1x128xf32, #tpu.memory_space<vmem>>, vector<1x128xf32>
    tpu.vector_store %arg8[%c0_17, %c0_18], %22 {strides = array<i32>} : memref<1x128xf32, #tpu.memory_space<vmem>>, vector<1x128xf32>,
    return
  }
  func.func @transform_0(%arg0: i32) -> (i32, i32) {
    %c0_i32 = arith.constant 0 : i32
    %c0_i32_0 = arith.constant 0 : i32
    return %c0_i32, %arg0 : i32, i32
  }
  func.func @transform_1(%arg0: i32) -> (i32, i32) {
    %c0_i32 = arith.constant 0 : i32
    %c0_i32_0 = arith.constant 0 : i32
    %c0_i32_1 = arith.constant 0 : i32
    return %c0_i32, %c0_i32_0 : i32, i32
  }
  func.func @transform_2(%arg0: i32) -> (i32, i32) {
    %c0_i32 = arith.constant 0 : i32
    %c0_i32_0 = arith.constant 0 : i32
    %c0_i32_1 = arith.constant 0 : i32
    return %c0_i32, %c0_i32_0 : i32, i32
  }
  func.func @transform_3(%arg0: i32) -> (i32, i32) {
    %c0_i32 = arith.constant 0 : i32
    %c0_i32_0 = arith.constant 0 : i32
    %c0_i32_1 = arith.constant 0 : i32
    return %c0_i32, %c0_i32_0 : i32, i32
  }
  func.func @transform_4(%arg0: i32) -> (i32, i32) {
    %c0_i32 = arith.constant 0 : i32
    %c0_i32_0 = arith.constant 0 : i32
    %c0_i32_1 = arith.constant 0 : i32
    return %c0_i32, %c0_i32_0 : i32, i32
  }
  func.func @transform_5(%arg0: i32) -> (i32, i32) {
    %c0_i32 = arith.constant 0 : i32
    %c0_i32_0 = arith.constant 0 : i32
    %c0_i32_1 = arith.constant 0 : i32
    return %c0_i32, %c0_i32_0 : i32, i32
  }
  func.func @transform_6(%arg0: i32) -> (i32, i32) {
    %c0_i32 = arith.constant 0 : i32
    %c0_i32_0 = arith.constant 0 : i32
    %c0_i32_1 = arith.constant 0 : i32
    return %c0_i32, %c0_i32_0 : i32, i32
  }
  func.func @transform_7(%arg0: i32) -> (i32, i32) {
    %c0_i32 = arith.constant 0 : i32
    %c0_i32_0 = arith.constant 0 : i32
    return %c0_i32, %arg0 : i32, i32
  }
}

</mosaic_0001>

<llo_original>
// kernel: discriminator_forward.1
$region0: #{discriminator_forward.1}
  #allocation0 [shape = 'u32[]', space=smem, size = 0x4, offset = 0x4, fixed_abs, tag = 'smem constant byte address 0x4 - core index']
  #allocation1 [shape = 'u32[144,128]{1,0:T(1,128)}', space=vmem, size = 0x12000, scoped, tag = 'internal scratch']
  #allocation2 [shape = 'f32[1,1]{1,0:T(1,128)S(6)}', space=smem, size = 0x200, scoped, tag = 'scoped memory for discriminator_forward.1']
  %s0 = inlined_call_operand.vmem [shape: f32[4,8], index: 0, kind: input, shape index: {}]
  %s1 = inlined_call_operand.vmem [shape: f32[128,4], index: 1, kind: input, shape index: {}]
  %s2 = inlined_call_operand.vmem [shape: f32[128,1], index: 2, kind: input, shape index: {}]
  %s3 = inlined_call_operand.vmem [shape: f32[128,128], index: 3, kind: input, shape index: {}]
  %s4 = inlined_call_operand.vmem [shape: f32[128,1], index: 4, kind: input, shape index: {}]
  %s5 = inlined_call_operand.vmem [shape: f32[8,128], index: 5, kind: input, shape index: {}]
  %s6 = inlined_call_operand.<no memory space> [shape: f32[1,1], index: 6, kind: input, shape index: {}]
  %s7 = inlined_call_operand.hbm [shape: f32[1,8], index: 7, kind: output, shape index: {}]
  %s8 = sld [smem:[#allocation0]]
  $region38: #{discriminator_forward.1} parent=0
    _
  %s10 = ssub.s32 1, %s8
  %s11 = scalar_select 0, %s10, %s8
  %12 = sst [smem:[#allocation2]] %s6
  $region1: #{discriminator_forward.1} parent=0
    #allocation3 [shape = 'u8[512]{0}', space=vmem, size = 0x400, scoped, tag = 'output window, operand 0, single buffered']
    #allocation4 [shape = 's32[1]{0}', space=sflag, size = 0x4, scoped, tag = 'scoped memory for discriminator_forward.1']
    %13 = vsyncpa [#allocation4], 0
    // Predicated region
    $region2: #{discriminator_forward.1} parent=1 // pred_check
      _
    $region3: #{discriminator_forward.1} parent=1 // pred_check_branch
      %15 = sbr.rel (0) target = $region5
    $region4: #{discriminator_forward.1} parent=1 // pred_region
      _
    $region5: #{discriminator_forward.1} parent=1 // pred_fallthru
      _
    // Predicated region
    $region6: #{discriminator_forward.1} parent=1 // pred_check
      _
    $region7: #{discriminator_forward.1} parent=1 // pred_check_branch
      %17 = sbr.rel (0) target = $region9
    $region8: #{discriminator_forward.1} parent=1 // pred_region
      _
    $region9: #{discriminator_forward.1} parent=1 // pred_fallthru
      _
    // Predicated region
    $region10: #{discriminator_forward.1} parent=1 // pred_check
      _
    $region11: #{discriminator_forward.1} parent=1 // pred_check_branch
      %19 = sbr.rel (0) target = $region13
    $region12: #{discriminator_forward.1} parent=1 // pred_region
      _
    $region13: #{discriminator_forward.1} parent=1 // pred_fallthru
      _
    // Predicated region
    $region14: #{discriminator_forward.1} parent=1 // pred_check
      _
    $region15: #{discriminator_forward.1} parent=1 // pred_check_branch
      %21 = sbr.rel (0) target = $region17
    $region16: #{discriminator_forward.1} parent=1 // pred_region
      _
    $region17: #{discriminator_forward.1} parent=1 // pred_fallthru
      _
    // Predicated region
    $region18: #{discriminator_forward.1} parent=1 // pred_check
      _
    $region19: #{discriminator_forward.1} parent=1 // pred_check_branch
      %23 = sbr.rel (0) target = $region21
    $region20: #{discriminator_forward.1} parent=1 // pred_region
      _
    $region21: #{discriminator_forward.1} parent=1 // pred_fallthru
      _
    // Predicated region
    $region22: #{discriminator_forward.1} parent=1 // pred_check
      _
    $region23: #{discriminator_forward.1} parent=1 // pred_check_branch
      %25 = sbr.rel (0) target = $region25
    $region24: #{discriminator_forward.1} parent=1 // pred_region
      _
    $region25: #{discriminator_forward.1} parent=1 // pred_fallthru
      _
    // Predicated region
    $region26: #{discriminator_forward.1} parent=1 // pred_check
      _
    $region27: #{discriminator_forward.1} parent=1 // pred_check_branch
      %27 = sbr.rel (0) target = $region29
    $region28: #{discriminator_forward.1} parent=1 // pred_region
      _
    $region29: #{discriminator_forward.1} parent=1 // pred_fallthru
      _
    %v28 = vld [vmem:[%s0] sm:$0xf]
    %v29 = vld [vmem:[%s1] sm:$0xff]
    %v30 = vld [vmem:[%s1 + $0x8] sm:$0xff]
    %v31 = vld [vmem:[%s1 + $0x10] sm:$0xff]
    %v32 = vld [vmem:[%s1 + $0x18] sm:$0xff]
    %v33 = vld [vmem:[%s1 + $0x20] sm:$0xff]
    %v34 = vld [vmem:[%s1 + $0x28] sm:$0xff]
    %v35 = vld [vmem:[%s1 + $0x30] sm:$0xff]
    %v36 = vld [vmem:[%s1 + $0x38] sm:$0xff]
    %v37 = vld [vmem:[%s1 + $0x40] sm:$0xff]
    %v38 = vld [vmem:[%s1 + $0x48] sm:$0xff]
    %v39 = vld [vmem:[%s1 + $0x50] sm:$0xff]
    %v40 = vld [vmem:[%s1 + $0x58] sm:$0xff]
    %v41 = vld [vmem:[%s1 + $0x60] sm:$0xff]
    %v42 = vld [vmem:[%s1 + $0x68] sm:$0xff]
    %v43 = vld [vmem:[%s1 + $0x70] sm:$0xff]
    %v44 = vld [vmem:[%s1 + $0x78] sm:$0xff]
    %v45 = vld [vmem:[%s2] sm:$0xff]
    %v46 = vld [vmem:[%s2 + $0x8] sm:$0xff]
    %v47 = vld [vmem:[%s2 + $0x10] sm:$0xff]
    %v48 = vld [vmem:[%s2 + $0x18] sm:$0xff]
    %v49 = vld [vmem:[%s2 + $0x20] sm:$0xff]
    %v50 = vld [vmem:[%s2 + $0x28] sm:$0xff]
    %v51 = vld [vmem:[%s2 + $0x30] sm:$0xff]
    %v52 = vld [vmem:[%s2 + $0x38] sm:$0xff]
    %v53 = vld [vmem:[%s2 + $0x40] sm:$0xff]
    %v54 = vld [vmem:[%s2 + $0x48] sm:$0xff]
    %v55 = vld [vmem:[%s2 + $0x50] sm:$0xff]
    %v56 = vld [vmem:[%s2 + $0x58] sm:$0xff]
    %v57 = vld [vmem:[%s2 + $0x60] sm:$0xff]
    %v58 = vld [vmem:[%s2 + $0x68] sm:$0xff]
    %v59 = vld [vmem:[%s2 + $0x70] sm:$0xff]
    %v60 = vld [vmem:[%s2 + $0x78] sm:$0xff]
    %62 = vset.pattern.permute.xlu0 0
    %63 = vperm.xlu0 %62, %v45
    %v64 = vpop.permute.xlu0 %63
    %67 = vset.pattern.permute.xlu0 0
    %68 = vperm.xlu0 %67, %v46
    %v69 = vpop.permute.xlu0 %68
    %72 = vset.pattern.permute.xlu0 0
    %73 = vperm.xlu0 %72, %v47
    %v74 = vpop.permute.xlu0 %73
    %77 = vset.pattern.permute.xlu0 0
    %78 = vperm.xlu0 %77, %v48
    %v79 = vpop.permute.xlu0 %78
    %82 = vset.pattern.permute.xlu0 0
    %83 = vperm.xlu0 %82, %v49
    %v84 = vpop.permute.xlu0 %83
    %87 = vset.pattern.permute.xlu0 0
    %88 = vperm.xlu0 %87, %v50
    %v89 = vpop.permute.xlu0 %88
    %92 = vset.pattern.permute.xlu0 0
    %93 = vperm.xlu0 %92, %v51
    %v94 = vpop.permute.xlu0 %93
    %97 = vset.pattern.permute.xlu0 0
    %98 = vperm.xlu0 %97, %v52
    %v99 = vpop.permute.xlu0 %98
    %102 = vset.pattern.permute.xlu0 0
    %103 = vperm.xlu0 %102, %v53
    %v104 = vpop.permute.xlu0 %103
    %107 = vset.pattern.permute.xlu0 0
    %108 = vperm.xlu0 %107, %v54
    %v109 = vpop.permute.xlu0 %108
    %112 = vset.pattern.permute.xlu0 0
    %113 = vperm.xlu0 %112, %v55
    %v114 = vpop.permute.xlu0 %113
    %117 = vset.pattern.permute.xlu0 0
    %118 = vperm.xlu0 %117, %v56
    %v119 = vpop.permute.xlu0 %118
    %122 = vset.pattern.permute.xlu0 0
    %123 = vperm.xlu0 %122, %v57
    %v124 = vpop.permute.xlu0 %123
    %127 = vset.pattern.permute.xlu0 0
    %128 = vperm.xlu0 %127, %v58
    %v129 = vpop.permute.xlu0 %128
    %132 = vset.pattern.permute.xlu0 0
    %133 = vperm.xlu0 %132, %v59
    %v134 = vpop.permute.xlu0 %133
    %137 = vset.pattern.permute.xlu0 0
    %138 = vperm.xlu0 %137, %v60
    %v139 = vpop.permute.xlu0 %138
    %vm141 = vcmask 31744
    %v143 = vsel %vm141, %v29, 0
    %v146 = vsel %vm141, %v30, 0
    %v149 = vsel %vm141, %v31, 0
    %v152 = vsel %vm141, %v32, 0
    %v155 = vsel %vm141, %v33, 0
    %v158 = vsel %vm141, %v34, 0
    %v161 = vsel %vm141, %v35, 0
    %v164 = vsel %vm141, %v36, 0
    %v167 = vsel %vm141, %v37, 0
    %v170 = vsel %vm141, %v38, 0
    %v173 = vsel %vm141, %v39, 0
    %v176 = vsel %vm141, %v40, 0
    %v179 = vsel %vm141, %v41, 0
    %v182 = vsel %vm141, %v42, 0
    %v185 = vsel %vm141, %v43, 0
    %v188 = vsel %vm141, %v44, 0
    %vm190 = vcmask 1043456
    %v192 = vsel %vm190, %v28, 0
    %194 = vmatprep.subr.mxu0 0.0
    %195 = vmatpush1.msra.mxu0 %v192
    %196 = vmatprep.subr.mxu0 0.0
    %197 = vmatpush1.msra.mxu0 0.0
    %198 = vmatprep.subr.mxu0 0.0
    %199 = vmatpush1.msra.mxu0 0.0
    %200 = vmatprep.subr.mxu0 0.0
    %201 = vmatpush1.msra.mxu0 0.0
    %202 = vmatprep.subr.mxu0 0.0
    %203 = vmatpush1.msra.mxu0 0.0
    %204 = vmatprep.subr.mxu0 0.0
    %205 = vmatpush1.msra.mxu0 0.0
    %206 = vmatprep.subr.mxu0 0.0
    %207 = vmatpush1.msra.mxu0 0.0
    %208 = vmatprep.subr.mxu0 0.0
    %209 = vmatpush1.msra.mxu0 0.0
    %210 = vmatprep.subr.mxu0 0.0
    %211 = vmatpush1.msra.mxu0 0.0
    %212 = vmatprep.subr.mxu0 0.0
    %213 = vmatpush1.msra.mxu0 0.0
    %214 = vmatprep.subr.mxu0 0.0
    %215 = vmatpush1.msra.mxu0 0.0
    %216 = vmatprep.subr.mxu0 0.0
    %217 = vmatpush1.msra.mxu0 0.0
    %218 = vmatprep.subr.mxu0 0.0
    %219 = vmatpush1.msra.mxu0 0.0
    %220 = vmatprep.subr.mxu0 0.0
    %221 = vmatpush1.msra.mxu0 0.0
    %222 = vmatprep.subr.mxu0 0.0
    %223 = vmatpush1.msra.mxu0 0.0
    %224 = vmatprep.subr.mxu0 0.0
    %225 = vmatpush1.msra.mxu0 0.0
    %226 = vmatprep.subr.mxu0 0.0
    %227 = vmatpush1.msra.mxu0 0.0
    %228 = vmatprep.subr.mxu0 0.0
    %229 = vmatpush1.msra.mxu0 0.0
    %230 = vmatprep.subr.mxu0 0.0
    %231 = vmatpush1.msra.mxu0 0.0
    %232 = vmatprep.subr.mxu0 0.0
    %233 = vmatpush1.msra.mxu0 0.0
    %234 = vmatprep.subr.mxu0 0.0
    %235 = vmatpush1.msra.mxu0 0.0
    %236 = vmatprep.subr.mxu0 0.0
    %237 = vmatpush1.msra.mxu0 0.0
    %238 = vmatprep.subr.mxu0 0.0
    %239 = vmatpush1.msra.mxu0 0.0
    %240 = vmatprep.subr.mxu0 0.0
    %241 = vmatpush1.msra.mxu0 0.0
    %242 = vmatprep.subr.mxu0 0.0
    %243 = vmatpush1.msra.mxu0 0.0
    %244 = vmatprep.subr.mxu0 0.0
    %245 = vmatpush1.msra.mxu0 0.0
    %246 = vmatprep.subr.mxu0 0.0
    %247 = vmatpush1.msra.mxu0 0.0
    %248 = vmatprep.subr.mxu0 0.0
    %249 = vmatpush1.msra.mxu0 0.0
    %250 = vmatprep.subr.mxu0 0.0
    %251 = vmatpush1.msra.mxu0 0.0
    %252 = vmatprep.subr.mxu0 0.0
    %253 = vmatpush1.msra.mxu0 0.0
    %254 = vmatprep.subr.mxu0 0.0
    %255 = vmatpush1.msra.mxu0 0.0
    %256 = vmatprep.subr.mxu0 0.0
    %257 = vmatpush1.msra.mxu0 0.0
    %258 = vmatprep.mubr.f32.mxu0 0.0
    %259 = vmatmul.mubr.f32.gmra.mrb[0].mxu0 %v143
    %v260 = vpop.f32.mrb[0].mxu0
    %v261 = vadd.f32 %v64, %v260
    %v262 = vpop.f32.mrb[0].mxu0
    %263 = vmatprep.mubr.f32.mxu0 0.0
    %264 = vmatmul.mubr.f32.gmra.mrb[0].mxu0 %v146
    %v265 = vpop.f32.mrb[0].mxu0
    %v266 = vadd.f32 %v69, %v265
    %v267 = vpop.f32.mrb[0].mxu0
    %268 = vmatprep.mubr.f32.mxu0 0.0
    %269 = vmatmul.mubr.f32.gmra.mrb[0].mxu0 %v149
    %v270 = vpop.f32.mrb[0].mxu0
    %v271 = vadd.f32 %v74, %v270
    %v272 = vpop.f32.mrb[0].mxu0
    %273 = vmatprep.mubr.f32.mxu0 0.0
    %274 = vmatmul.mubr.f32.gmra.mrb[0].mxu0 %v152
    %v275 = vpop.f32.mrb[0].mxu0
    %v276 = vadd.f32 %v79, %v275
    %v277 = vpop.f32.mrb[0].mxu0
    %278 = vmatprep.mubr.f32.mxu0 0.0
    %279 = vmatmul.mubr.f32.gmra.mrb[0].mxu0 %v155
    %v280 = vpop.f32.mrb[0].mxu0
    %v281 = vadd.f32 %v84, %v280
    %v282 = vpop.f32.mrb[0].mxu0
    %283 = vmatprep.mubr.f32.mxu0 0.0
    %284 = vmatmul.mubr.f32.gmra.mrb[0].mxu0 %v158
    %v285 = vpop.f32.mrb[0].mxu0
    %v286 = vadd.f32 %v89, %v285
    %v287 = vpop.f32.mrb[0].mxu0
    %288 = vmatprep.mubr.f32.mxu0 0.0
    %289 = vmatmul.mubr.f32.gmra.mrb[0].mxu0 %v161
    %v290 = vpop.f32.mrb[0].mxu0
    %v291 = vadd.f32 %v94, %v290
    %v292 = vpop.f32.mrb[0].mxu0
    %293 = vmatprep.mubr.f32.mxu0 0.0
    %294 = vmatmul.mubr.f32.gmra.mrb[0].mxu0 %v164
    %v295 = vpop.f32.mrb[0].mxu0
    %v296 = vadd.f32 %v99, %v295
    %v297 = vpop.f32.mrb[0].mxu0
    %298 = vmatprep.mubr.f32.mxu0 0.0
    %299 = vmatmul.mubr.f32.gmra.mrb[0].mxu0 %v167
    %v300 = vpop.f32.mrb[0].mxu0
    %v301 = vadd.f32 %v104, %v300
    %v302 = vpop.f32.mrb[0].mxu0
    %303 = vmatprep.mubr.f32.mxu0 0.0
    %304 = vmatmul.mubr.f32.gmra.mrb[0].mxu0 %v170
    %v305 = vpop.f32.mrb[0].mxu0
    %v306 = vadd.f32 %v109, %v305
    %v307 = vpop.f32.mrb[0].mxu0
    %308 = vmatprep.mubr.f32.mxu0 0.0
    %309 = vmatmul.mubr.f32.gmra.mrb[0].mxu0 %v173
    %v310 = vpop.f32.mrb[0].mxu0
    %v311 = vadd.f32 %v114, %v310
    %v312 = vpop.f32.mrb[0].mxu0
    %313 = vmatprep.mubr.f32.mxu0 0.0
    %314 = vmatmul.mubr.f32.gmra.mrb[0].mxu0 %v176
    %v315 = vpop.f32.mrb[0].mxu0
    %v316 = vadd.f32 %v119, %v315
    %v317 = vpop.f32.mrb[0].mxu0
    %318 = vmatprep.mubr.f32.mxu0 0.0
    %319 = vmatmul.mubr.f32.gmra.mrb[0].mxu0 %v179
    %v320 = vpop.f32.mrb[0].mxu0
    %v321 = vadd.f32 %v124, %v320
    %v322 = vpop.f32.mrb[0].mxu0
    %323 = vmatprep.mubr.f32.mxu0 0.0
    %324 = vmatmul.mubr.f32.gmra.mrb[0].mxu0 %v182
    %v325 = vpop.f32.mrb[0].mxu0
    %v326 = vadd.f32 %v129, %v325
    %v327 = vpop.f32.mrb[0].mxu0
    %328 = vmatprep.mubr.f32.mxu0 0.0
    %329 = vmatmul.mubr.f32.gmra.mrb[0].mxu0 %v185
    %v330 = vpop.f32.mrb[0].mxu0
    %v331 = vadd.f32 %v134, %v330
    %v332 = vpop.f32.mrb[0].mxu0
    %333 = vmatprep.mubr.f32.mxu0 0.0
    %334 = vmatmul.mubr.f32.gmra.mrb[0].mxu0 %v188
    %v335 = vpop.f32.mrb[0].mxu0
    %v336 = vadd.f32 %v139, %v335
    %v337 = vpop.f32.mrb[0].mxu0
    %338 = vdwg.mxu0
    %v339 = vmul.f32 %v261, 0.2
    %v340 = vmul.f32 %v266, 0.2
    %v341 = vmul.f32 %v271, 0.2
    %v342 = vmul.f32 %v276, 0.2
    %v343 = vmul.f32 %v281, 0.2
    %v344 = vmul.f32 %v286, 0.2
    %v345 = vmul.f32 %v291, 0.2
    %v346 = vmul.f32 %v296, 0.2
    %v347 = vmul.f32 %v301, 0.2
    %v348 = vmul.f32 %v306, 0.2
    %v349 = vmul.f32 %v311, 0.2
    %v350 = vmul.f32 %v316, 0.2
    %v351 = vmul.f32 %v321, 0.2
    %v352 = vmul.f32 %v326, 0.2
    %v353 = vmul.f32 %v331, 0.2
    %v354 = vmul.f32 %v336, 0.2
    %v355 = vmax.f32 %v261, %v339
    %v356 = vmax.f32 %v266, %v340
    %v357 = vmax.f32 %v271, %v341
    %v358 = vmax.f32 %v276, %v342
    %v359 = vmax.f32 %v281, %v343
    %v360 = vmax.f32 %v286, %v344
    %v361 = vmax.f32 %v291, %v345
    %v362 = vmax.f32 %v296, %v346
    %v363 = vmax.f32 %v301, %v347
    %v364 = vmax.f32 %v306, %v348
    %v365 = vmax.f32 %v311, %v349
    %v366 = vmax.f32 %v316, %v350
    %v367 = vmax.f32 %v321, %v351
    %v368 = vmax.f32 %v326, %v352
    %v369 = vmax.f32 %v331, %v353
    %v370 = vmax.f32 %v336, %v354
    %v371 = vld [vmem:[%s3] sm:$0xff]
    %v372 = vld [vmem:[%s3 + $0x8] sm:$0xff]
    %v373 = vld [vmem:[%s3 + $0x10] sm:$0xff]
    %v374 = vld [vmem:[%s3 + $0x18] sm:$0xff]
    %v375 = vld [vmem:[%s3 + $0x20] sm:$0xff]
    %v376 = vld [vmem:[%s3 + $0x28] sm:$0xff]
    %v377 = vld [vmem:[%s3 + $0x30] sm:$0xff]
    %v378 = vld [vmem:[%s3 + $0x38] sm:$0xff]
    %v379 = vld [vmem:[%s3 + $0x40] sm:$0xff]
    %v380 = vld [vmem:[%s3 + $0x48] sm:$0xff]
    %v381 = vld [vmem:[%s3 + $0x50] sm:$0xff]
    %v382 = vld [vmem:[%s3 + $0x58] sm:$0xff]
    %v383 = vld [vmem:[%s3 + $0x60] sm:$0xff]
    %v384 = vld [vmem:[%s3 + $0x68] sm:$0xff]
    %v385 = vld [vmem:[%s3 + $0x70] sm:$0xff]
    %v386 = vld [vmem:[%s3 + $0x78] sm:$0xff]
    %v387 = vld [vmem:[%s4] sm:$0xff]
    %v388 = vld [vmem:[%s4 + $0x8] sm:$0xff]
    %v389 = vld [vmem:[%s4 + $0x10] sm:$0xff]
    %v390 = vld [vmem:[%s4 + $0x18] sm:$0xff]
    %v391 = vld [vmem:[%s4 + $0x20] sm:$0xff]
    %v392 = vld [vmem:[%s4 + $0x28] sm:$0xff]
    %v393 = vld [vmem:[%s4 + $0x30] sm:$0xff]
    %v394 = vld [vmem:[%s4 + $0x38] sm:$0xff]
    %v395 = vld [vmem:[%s4 + $0x40] sm:$0xff]
    %v396 = vld [vmem:[%s4 + $0x48] sm:$0xff]
    %v397 = vld [vmem:[%s4 + $0x50] sm:$0xff]
    %v398 = vld [vmem:[%s4 + $0x58] sm:$0xff]
    %v399 = vld [vmem:[%s4 + $0x60] sm:$0xff]
    %v400 = vld [vmem:[%s4 + $0x68] sm:$0xff]
    %v401 = vld [vmem:[%s4 + $0x70] sm:$0xff]
    %v402 = vld [vmem:[%s4 + $0x78] sm:$0xff]
    %404 = vset.pattern.permute.xlu0 0
    %405 = vperm.xlu0 %404, %v387
    %v406 = vpop.permute.xlu0 %405
    %409 = vset.pattern.permute.xlu0 0
    %410 = vperm.xlu0 %409, %v388
    %v411 = vpop.permute.xlu0 %410
    %414 = vset.pattern.permute.xlu0 0
    %415 = vperm.xlu0 %414, %v389
    %v416 = vpop.permute.xlu0 %415
    %419 = vset.pattern.permute.xlu0 0
    %420 = vperm.xlu0 %419, %v390
    %v421 = vpop.permute.xlu0 %420
    %424 = vset.pattern.permute.xlu0 0
    %425 = vperm.xlu0 %424, %v391
    %v426 = vpop.permute.xlu0 %425
    %429 = vset.pattern.permute.xlu0 0
    %430 = vperm.xlu0 %429, %v392
    %v431 = vpop.permute.xlu0 %430
    %434 = vset.pattern.permute.xlu0 0
    %435 = vperm.xlu0 %434, %v393
    %v436 = vpop.permute.xlu0 %435
    %439 = vset.pattern.permute.xlu0 0
    %440 = vperm.xlu0 %439, %v394
    %v441 = vpop.permute.xlu0 %440
    %444 = vset.pattern.permute.xlu0 0
    %445 = vperm.xlu0 %444, %v395
    %v446 = vpop.permute.xlu0 %445
    %449 = vset.pattern.permute.xlu0 0
    %450 = vperm.xlu0 %449, %v396
    %v451 = vpop.permute.xlu0 %450
    %454 = vset.pattern.permute.xlu0 0
    %455 = vperm.xlu0 %454, %v397
    %v456 = vpop.permute.xlu0 %455
    %459 = vset.pattern.permute.xlu0 0
    %460 = vperm.xlu0 %459, %v398
    %v461 = vpop.permute.xlu0 %460
    %464 = vset.pattern.permute.xlu0 0
    %465 = vperm.xlu0 %464, %v399
    %v466 = vpop.permute.xlu0 %465
    %469 = vset.pattern.permute.xlu0 0
    %470 = vperm.xlu0 %469, %v400
    %v471 = vpop.permute.xlu0 %470
    %474 = vset.pattern.permute.xlu0 0
    %475 = vperm.xlu0 %474, %v401
    %v476 = vpop.permute.xlu0 %475
    %479 = vset.pattern.permute.xlu0 0
    %480 = vperm.xlu0 %479, %v402
    %v481 = vpop.permute.xlu0 %480
    %483 = vmatprep.subr.mxu0 0.0
    %484 = vmatpush1.msra.mxu0 %v355
    %485 = vmatprep.subr.mxu0 0.0
    %486 = vmatpush1.msra.mxu0 %v356
    %487 = vmatprep.subr.mxu0 0.0
    %488 = vmatpush1.msra.mxu0 %v357
    %489 = vmatprep.subr.mxu0 0.0
    %490 = vmatpush1.msra.mxu0 %v358
    %491 = vmatprep.subr.mxu0 0.0
    %492 = vmatpush1.msra.mxu0 %v359
    %493 = vmatprep.subr.mxu0 0.0
    %494 = vmatpush1.msra.mxu0 %v360
    %495 = vmatprep.subr.mxu0 0.0
    %496 = vmatpush1.msra.mxu0 %v361
    %497 = vmatprep.subr.mxu0 0.0
    %498 = vmatpush1.msra.mxu0 %v362
    %499 = vmatprep.subr.mxu0 0.0
    %500 = vmatpush1.msra.mxu0 %v363
    %501 = vmatprep.subr.mxu0 0.0
    %502 = vmatpush1.msra.mxu0 %v364
    %503 = vmatprep.subr.mxu0 0.0
    %504 = vmatpush1.msra.mxu0 %v365
    %505 = vmatprep.subr.mxu0 0.0
    %506 = vmatpush1.msra.mxu0 %v366
    %507 = vmatprep.subr.mxu0 0.0
    %508 = vmatpush1.msra.mxu0 %v367
    %509 = vmatprep.subr.mxu0 0.0
    %510 = vmatpush1.msra.mxu0 %v368
    %511 = vmatprep.subr.mxu0 0.0
    %512 = vmatpush1.msra.mxu0 %v369
    %513 = vmatprep.subr.mxu0 0.0
    %514 = vmatpush1.msra.mxu0 %v370
    %515 = vmatprep.subr.mxu0 0.0
    %516 = vmatpush1.msra.mxu0 0.0
    %517 = vmatprep.subr.mxu0 0.0
    %518 = vmatpush1.msra.mxu0 0.0
    %519 = vmatprep.subr.mxu0 0.0
    %520 = vmatpush1.msra.mxu0 0.0
    %521 = vmatprep.subr.mxu0 0.0
    %522 = vmatpush1.msra.mxu0 0.0
    %523 = vmatprep.subr.mxu0 0.0
    %524 = vmatpush1.msra.mxu0 0.0
    %525 = vmatprep.subr.mxu0 0.0
    %526 = vmatpush1.msra.mxu0 0.0
    %527 = vmatprep.subr.mxu0 0.0
    %528 = vmatpush1.msra.mxu0 0.0
    %529 = vmatprep.subr.mxu0 0.0
    %530 = vmatpush1.msra.mxu0 0.0
    %531 = vmatprep.subr.mxu0 0.0
    %532 = vmatpush1.msra.mxu0 0.0
    %533 = vmatprep.subr.mxu0 0.0
    %534 = vmatpush1.msra.mxu0 0.0
    %535 = vmatprep.subr.mxu0 0.0
    %536 = vmatpush1.msra.mxu0 0.0
    %537 = vmatprep.subr.mxu0 0.0
    %538 = vmatpush1.msra.mxu0 0.0
    %539 = vmatprep.subr.mxu0 0.0
    %540 = vmatpush1.msra.mxu0 0.0
    %541 = vmatprep.subr.mxu0 0.0
    %542 = vmatpush1.msra.mxu0 0.0
    %543 = vmatprep.subr.mxu0 0.0
    %544 = vmatpush1.msra.mxu0 0.0
    %545 = vmatprep.subr.mxu0 0.0
    %546 = vmatpush1.msra.mxu0 0.0
    %547 = vmatprep.mubr.f32.mxu0 0.0
    %548 = vmatmul.mubr.f32.gmra.mrb[0].mxu0 %v371
    %v549 = vpop.f32.mrb[0].mxu0
    %v550 = vadd.f32 %v406, %v549
    %v551 = vpop.f32.mrb[0].mxu0
    %552 = vmatprep.mubr.f32.mxu0 0.0
    %553 = vmatmul.mubr.f32.gmra.mrb[0].mxu0 %v372
    %v554 = vpop.f32.mrb[0].mxu0
    %v555 = vadd.f32 %v411, %v554
    %v556 = vpop.f32.mrb[0].mxu0
    %557 = vmatprep.mubr.f32.mxu0 0.0
    %558 = vmatmul.mubr.f32.gmra.mrb[0].mxu0 %v373
    %v559 = vpop.f32.mrb[0].mxu0
    %v560 = vadd.f32 %v416, %v559
    %v561 = vpop.f32.mrb[0].mxu0
    %562 = vmatprep.mubr.f32.mxu0 0.0
    %563 = vmatmul.mubr.f32.gmra.mrb[0].mxu0 %v374
    %v564 = vpop.f32.mrb[0].mxu0
    %v565 = vadd.f32 %v421, %v564
    %v566 = vpop.f32.mrb[0].mxu0
    %567 = vmatprep.mubr.f32.mxu0 0.0
    %568 = vmatmul.mubr.f32.gmra.mrb[0].mxu0 %v375
    %v569 = vpop.f32.mrb[0].mxu0
    %v570 = vadd.f32 %v426, %v569
    %v571 = vpop.f32.mrb[0].mxu0
    %572 = vmatprep.mubr.f32.mxu0 0.0
    %573 = vmatmul.mubr.f32.gmra.mrb[0].mxu0 %v376
    %v574 = vpop.f32.mrb[0].mxu0
    %v575 = vadd.f32 %v431, %v574
    %v576 = vpop.f32.mrb[0].mxu0
    %577 = vmatprep.mubr.f32.mxu0 0.0
    %578 = vmatmul.mubr.f32.gmra.mrb[0].mxu0 %v377
    %v579 = vpop.f32.mrb[0].mxu0
    %v580 = vadd.f32 %v436, %v579
    %v581 = vpop.f32.mrb[0].mxu0
    %582 = vmatprep.mubr.f32.mxu0 0.0
    %583 = vmatmul.mubr.f32.gmra.mrb[0].mxu0 %v378
    %v584 = vpop.f32.mrb[0].mxu0
    %v585 = vadd.f32 %v441, %v584
    %v586 = vpop.f32.mrb[0].mxu0
    %587 = vmatprep.mubr.f32.mxu0 0.0
    %588 = vmatmul.mubr.f32.gmra.mrb[0].mxu0 %v379
    %v589 = vpop.f32.mrb[0].mxu0
    %v590 = vadd.f32 %v446, %v589
    %v591 = vpop.f32.mrb[0].mxu0
    %592 = vmatprep.mubr.f32.mxu0 0.0
    %593 = vmatmul.mubr.f32.gmra.mrb[0].mxu0 %v380
    %v594 = vpop.f32.mrb[0].mxu0
    %v595 = vadd.f32 %v451, %v594
    %v596 = vpop.f32.mrb[0].mxu0
    %597 = vmatprep.mubr.f32.mxu0 0.0
    %598 = vmatmul.mubr.f32.gmra.mrb[0].mxu0 %v381
    %v599 = vpop.f32.mrb[0].mxu0
    %v600 = vadd.f32 %v456, %v599
    %v601 = vpop.f32.mrb[0].mxu0
    %602 = vmatprep.mubr.f32.mxu0 0.0
    %603 = vmatmul.mubr.f32.gmra.mrb[0].mxu0 %v382
    %v604 = vpop.f32.mrb[0].mxu0
    %v605 = vadd.f32 %v461, %v604
    %v606 = vpop.f32.mrb[0].mxu0
    %607 = vmatprep.mubr.f32.mxu0 0.0
    %608 = vmatmul.mubr.f32.gmra.mrb[0].mxu0 %v383
    %v609 = vpop.f32.mrb[0].mxu0
    %v610 = vadd.f32 %v466, %v609
    %v611 = vpop.f32.mrb[0].mxu0
    %612 = vmatprep.mubr.f32.mxu0 0.0
    %613 = vmatmul.mubr.f32.gmra.mrb[0].mxu0 %v384
    %v614 = vpop.f32.mrb[0].mxu0
    %v615 = vadd.f32 %v471, %v614
    %v616 = vpop.f32.mrb[0].mxu0
    %617 = vmatprep.mubr.f32.mxu0 0.0
    %618 = vmatmul.mubr.f32.gmra.mrb[0].mxu0 %v385
    %v619 = vpop.f32.mrb[0].mxu0
    %v620 = vadd.f32 %v476, %v619
    %v621 = vpop.f32.mrb[0].mxu0
    %622 = vmatprep.mubr.f32.mxu0 0.0
    %623 = vmatmul.mubr.f32.gmra.mrb[0].mxu0 %v386
    %v624 = vpop.f32.mrb[0].mxu0
    %v625 = vadd.f32 %v481, %v624
    %v626 = vpop.f32.mrb[0].mxu0
    %627 = vdwg.mxu0
    %v628 = vmul.f32 %v550, 0.2
    %v629 = vmul.f32 %v555, 0.2
    %v630 = vmul.f32 %v560, 0.2
    %v631 = vmul.f32 %v565, 0.2
    %v632 = vmul.f32 %v570, 0.2
    %v633 = vmul.f32 %v575, 0.2
    %v634 = vmul.f32 %v580, 0.2
    %v635 = vmul.f32 %v585, 0.2
    %v636 = vmul.f32 %v590, 0.2
    %v637 = vmul.f32 %v595, 0.2
    %v638 = vmul.f32 %v600, 0.2
    %v639 = vmul.f32 %v605, 0.2
    %v640 = vmul.f32 %v610, 0.2
    %v641 = vmul.f32 %v615, 0.2
    %v642 = vmul.f32 %v620, 0.2
    %v643 = vmul.f32 %v625, 0.2
    %v644 = vmax.f32 %v550, %v628
    %v645 = vmax.f32 %v555, %v629
    %v646 = vmax.f32 %v560, %v630
    %v647 = vmax.f32 %v565, %v631
    %v648 = vmax.f32 %v570, %v632
    %v649 = vmax.f32 %v575, %v633
    %v650 = vmax.f32 %v580, %v634
    %v651 = vmax.f32 %v585, %v635
    %v652 = vmax.f32 %v590, %v636
    %v653 = vmax.f32 %v595, %v637
    %v654 = vmax.f32 %v600, %v638
    %v655 = vmax.f32 %v605, %v639
    %v656 = vmax.f32 %v610, %v640
    %v657 = vmax.f32 %v615, %v641
    %v658 = vmax.f32 %v620, %v642
    %v659 = vmax.f32 %v625, %v643
    %v660 = vld [vmem:[%s5] sm:$0xff]
    %661 = vmatprep.subr.mxu0 0.0
    %662 = vmatpush1.msra.mxu0 %v644
    %663 = vmatprep.subr.mxu0 0.0
    %664 = vmatpush1.msra.mxu0 %v645
    %665 = vmatprep.subr.mxu0 0.0
    %666 = vmatpush1.msra.mxu0 %v646
    %667 = vmatprep.subr.mxu0 0.0
    %668 = vmatpush1.msra.mxu0 %v647
    %669 = vmatprep.subr.mxu0 0.0
    %670 = vmatpush1.msra.mxu0 %v648
    %671 = vmatprep.subr.mxu0 0.0
    %672 = vmatpush1.msra.mxu0 %v649
    %673 = vmatprep.subr.mxu0 0.0
    %674 = vmatpush1.msra.mxu0 %v650
    %675 = vmatprep.subr.mxu0 0.0
    %676 = vmatpush1.msra.mxu0 %v651
    %677 = vmatprep.subr.mxu0 0.0
    %678 = vmatpush1.msra.mxu0 %v652
    %679 = vmatprep.subr.mxu0 0.0
    %680 = vmatpush1.msra.mxu0 %v653
    %681 = vmatprep.subr.mxu0 0.0
    %682 = vmatpush1.msra.mxu0 %v654
    %683 = vmatprep.subr.mxu0 0.0
    %684 = vmatpush1.msra.mxu0 %v655
    %685 = vmatprep.subr.mxu0 0.0
    %686 = vmatpush1.msra.mxu0 %v656
    %687 = vmatprep.subr.mxu0 0.0
    %688 = vmatpush1.msra.mxu0 %v657
    %689 = vmatprep.subr.mxu0 0.0
    %690 = vmatpush1.msra.mxu0 %v658
    %691 = vmatprep.subr.mxu0 0.0
    %692 = vmatpush1.msra.mxu0 %v659
    %693 = vmatprep.subr.mxu0 0.0
    %694 = vmatpush1.msra.mxu0 0.0
    %695 = vmatprep.subr.mxu0 0.0
    %696 = vmatpush1.msra.mxu0 0.0
    %697 = vmatprep.subr.mxu0 0.0
    %698 = vmatpush1.msra.mxu0 0.0
    %699 = vmatprep.subr.mxu0 0.0
    %700 = vmatpush1.msra.mxu0 0.0
    %701 = vmatprep.subr.mxu0 0.0
    %702 = vmatpush1.msra.mxu0 0.0
    %703 = vmatprep.subr.mxu0 0.0
    %704 = vmatpush1.msra.mxu0 0.0
    %705 = vmatprep.subr.mxu0 0.0
    %706 = vmatpush1.msra.mxu0 0.0
    %707 = vmatprep.subr.mxu0 0.0
    %708 = vmatpush1.msra.mxu0 0.0
    %709 = vmatprep.subr.mxu0 0.0
    %710 = vmatpush1.msra.mxu0 0.0
    %711 = vmatprep.subr.mxu0 0.0
    %712 = vmatpush1.msra.mxu0 0.0
    %713 = vmatprep.subr.mxu0 0.0
    %714 = vmatpush1.msra.mxu0 0.0
    %715 = vmatprep.subr.mxu0 0.0
    %716 = vmatpush1.msra.mxu0 0.0
    %717 = vmatprep.subr.mxu0 0.0
    %718 = vmatpush1.msra.mxu0 0.0
    %719 = vmatprep.subr.mxu0 0.0
    %720 = vmatpush1.msra.mxu0 0.0
    %721 = vmatprep.subr.mxu0 0.0
    %722 = vmatpush1.msra.mxu0 0.0
    %723 = vmatprep.subr.mxu0 0.0
    %724 = vmatpush1.msra.mxu0 0.0
    %725 = vmatprep.mubr.f32.mxu0 0.0
    %726 = vmatmul.mubr.f32.gmra.mrb[0].mxu0 %v660
    %v727 = vpop.f32.mrb[0].mxu0
    %v728 = vadd.f32 0.0, %v727
    %v729 = vpop.f32.mrb[0].mxu0
    %730 = vdwg.mxu0
    %s731 = sld [smem:[#allocation2]]
    %v732 = vstv %s731
    %v733 = vadd.f32 %v728, %v732
    %734 = vst [vmem:[#allocation3] sm:$0x1] %v733
    // Predicated region
    $region30: #{discriminator_forward.1} parent=1 // pred_check
      _
    $region31: #{discriminator_forward.1} parent=1 // pred_check_branch
      %736 = sbr.rel (0) target = $region33
    $region32: #{discriminator_forward.1} parent=1 // pred_region
      %s738 = ssub.s32 16, 16
      %739 = vsyncadd [#allocation4], %s738
      %s741 = sshll.u32 [#allocation3], 4
      %s742 = int_to_ptr.vmem [resolvable:$true] %s741
      %744 = dma.vmem_to_hbm [thread:$0]  %s742, 16, %s7, [#allocation4]
    $region33: #{discriminator_forward.1} parent=1 // pred_fallthru
      _
    // Predicated region
    $region34: #{discriminator_forward.1} parent=1 // pred_check
      _
    $region35: #{discriminator_forward.1} parent=1 // pred_check_branch
      %746 = sbr.rel (0) target = $region37
    $region36: #{discriminator_forward.1} parent=1 // pred_region
      %747 = dma.done [#allocation4], 16
    $region37: #{discriminator_forward.1} parent=1 // pred_fallthru
      _
    %748 = vsyncpa [#allocation4], 1

</llo_original>
